<compile_context>
chip_gen: v6e
topology: v6e:2x2x1
jax: 0.10.0
libtpu: 0.0.40
codegen_flags: <defaults>
</compile_context>

<pallas_src>
import functools

import jax
import jax.numpy as jnp
from jax import lax
from jax.experimental import pallas as pl
from jax.experimental.pallas import tpu as pltpu


def _round_up(n, m):
    return ((n + m - 1) // m) * m


def _sublane_multiple(dtype):
    """Dtype-aware sublane tile: 8 for f32, 16 for bf16, 32 for int8/fp8."""
    itemsize = jnp.dtype(dtype).itemsize
    return max(8, 32 // max(1, itemsize))


# ---------------------------------------------------------------------------
# Single-step kernel:  out = ReLU( x @ Wi + h @ Wh + b )     (two MXU dots)
# ---------------------------------------------------------------------------
def rnn_cell_kernel(x_ref, h_ref, wi_ref, wh_ref, b_ref, out_ref):
    pre = jnp.dot(x_ref[...], wi_ref[...], preferred_element_type=jnp.float32)
    pre = pre + jnp.dot(h_ref[...], wh_ref[...], preferred_element_type=jnp.float32)
    out_ref[...] = jnp.maximum(pre + b_ref[...], 0.0).astype(out_ref.dtype)


def rnn_cell(x, h, wi, wh, bi, bh):
    """Single RNNCell step. x:(B,Din) h:(B,H) wi:(Din,H) wh:(H,H) bi/bh:(1,H) -> (B,H)."""
    B, Din = x.shape
    H = wh.shape[1]

    sub = _sublane_multiple(x.dtype)
    Bp = _round_up(B, sub)
    Dp = _round_up(Din, 128)
    Hp = _round_up(H, 128)

    x_p = jnp.pad(x, ((0, Bp - B), (0, Dp - Din)))
    h_p = jnp.pad(h, ((0, Bp - B), (0, Hp - H)))
    wi_p = jnp.pad(wi, ((0, Dp - Din), (0, Hp - H)))
    wh_p = jnp.pad(wh, ((0, Hp - H), (0, Hp - H)))
    b_p = jnp.pad(bi + bh, ((0, 0), (0, Hp - H)))          # folded bias

    out_p = pl.pallas_call(
        rnn_cell_kernel,
        out_shape=jax.ShapeDtypeStruct((Bp, Hp), x.dtype),
        grid=(),
        in_specs=[
            pl.BlockSpec((Bp, Dp), lambda: (0, 0)),
            pl.BlockSpec((Bp, Hp), lambda: (0, 0)),
            pl.BlockSpec((Dp, Hp), lambda: (0, 0)),
            pl.BlockSpec((Hp, Hp), lambda: (0, 0)),
            pl.BlockSpec((1, Hp), lambda: (0, 0)),
        ],
        out_specs=pl.BlockSpec((Bp, Hp), lambda: (0, 0)),
    )(x_p, h_p, wi_p, wh_p, b_p)
    return out_p[:B, :H]


# ---------------------------------------------------------------------------
# Sequence kernel: whole time loop inside ONE pallas_call.
# grid = (batch_tiles, time_chunks); each grid step processes C timesteps.
# ---------------------------------------------------------------------------
def rnn_seq_kernel(x_ref, wi_ref, wh_ref, b_ref, h0_ref, out_ref, h_ref, *, chunk):
    # x_ref  : (C, bt, Dp)   C timesteps of input for this (batch tile, time chunk)
    # wi_ref : (Dp, Hp)      resident input->hidden weights
    # wh_ref : (Hp, Hp)      resident hidden->hidden weights
    # b_ref  : (1, Hp)       resident folded bias (bi + bh)
    # h0_ref : (bt, Hp)      initial hidden state for this batch tile
    # out_ref: (C, bt, Hp)   hidden states emitted for this chunk
    # h_ref  : (bt, Hp) f32  scratch carrying h across steps / chunks
    t = pl.program_id(1)                 # time-chunk index (innermost grid axis)

    @pl.when(t == 0)
    def _():
        # Padded batch rows stay as zeros @ W + b -> harmless: matmul is
        # row-independent and those rows are sliced off in the wrapper.
        h_ref[...] = h0_ref[...].astype(h_ref.dtype)

    def step(c, carry):
        # Two view dots over the x-half and h-half of K instead of a fused-slab
        # dot: same MXU cycles, no per-step x -> slab copy through ld/st slots.
        pre = jnp.dot(x_ref[c], wi_ref[...], preferred_element_type=jnp.float32)
        pre = pre + jnp.dot(h_ref[...].astype(wh_ref.dtype), wh_ref[...],
                            preferred_element_type=jnp.float32)
        h_new = jnp.maximum(pre + b_ref[...], 0.0)
        h_ref[...] = h_new                       # carry to step c+1 / next chunk
        out_ref[c] = h_new.astype(out_ref.dtype)
        return carry

    lax.fori_loop(0, chunk, step, 0, unroll=True)


def rnn_cell_sequence(xs, h0, wi, wh, bi, bh, *, max_chunk=8, max_batch_tile=128):
    """Run the RNNCell over a sequence. xs:(T,B,Din), h0:(B,H) -> (T,B,H)."""
    T, B, Din = xs.shape
    H = wh.shape[1]

    sub = _sublane_multiple(xs.dtype)
    Dp = _round_up(Din, 128)
    Hp = _round_up(H, 128)

    # Batch: pad to sublane multiple; split into tiles so the "parallel" batch
    # grid axis can be sharded across v7x's two TensorCores.
    Bp = _round_up(B, sub)
    if Bp > max_batch_tile:
        Bp = _round_up(Bp, max_batch_tile)
        bt = max_batch_tile
    else:
        bt = Bp
    nb = Bp // bt

    # Time: C steps per grid iteration amortize per-step pipeline overhead.
    C = min(max_chunk, T)
    Tp = _round_up(T, C)
    nt = Tp // C

    xs_p = jnp.pad(xs, ((0, Tp - T), (0, Bp - B), (0, Dp - Din)))
    wi_p = jnp.pad(wi, ((0, Dp - Din), (0, Hp - H)))
    wh_p = jnp.pad(wh, ((0, Hp - H), (0, Hp - H)))
    b_p = jnp.pad(bi + bh, ((0, 0), (0, Hp - H)))          # folded bias, built once
    h0_p = jnp.pad(h0, ((0, Bp - B), (0, Hp - H)))

    a_sz = jnp.dtype(xs.dtype).itemsize
    w_sz = jnp.dtype(wi.dtype).itemsize

    def run(single_buffer_consts):
        # Explicit scoped-VMEM budget from the actual operand footprint.
        wbuf = 1 if single_buffer_consts else 2
        est = (Dp * Hp + Hp * Hp + Hp) * w_sz * wbuf           # resident weights/bias
        est += 2 * (C * bt * Dp + C * bt * Hp) * a_sz          # double-buffered x / out
        est += 2 * bt * Hp * a_sz                              # h0
        est += bt * Hp * 4                                     # f32 h scratch
        vmem_limit = int(min(64 << 20, max(4 << 20, est * 3 // 2 + (1 << 20))))

        def const_spec(shape):
            idx = lambda b, t: (0,) * len(shape)
            if single_buffer_consts:
                # Grid-invariant index map -> second buffer never used; halve
                # the dominant (weight) VMEM consumer.
                return pl.BlockSpec(shape, idx, pipeline_mode=pl.Buffered(1))
            return pl.BlockSpec(shape, idx)

        kernel = functools.partial(rnn_seq_kernel, chunk=C)
        return pl.pallas_call(
            kernel,
            out_shape=jax.ShapeDtypeStruct((Tp, Bp, Hp), xs.dtype),
            grid=(nb, nt),
            in_specs=[
                pl.BlockSpec((C, bt, Dp), lambda b, t: (t, b, 0)),   # x chunk
                const_spec((Dp, Hp)),                                # Wi (resident)
                const_spec((Hp, Hp)),                                # Wh (resident)
                const_spec((1, Hp)),                                 # folded bias
                pl.BlockSpec((bt, Hp), lambda b, t: (b, 0)),         # h0 per batch tile
            ],
            out_specs=pl.BlockSpec((C, bt, Hp), lambda b, t: (t, b, 0)),
            scratch_shapes=[pltpu.VMEM((bt, Hp), jnp.float32)],
            compiler_params=pltpu.CompilerParams(
                # Batch tiles are independent (megacore-parallel on v7x);
                # time must stay sequential for the h(t-1) -> h(t) carry.
                dimension_semantics=("parallel", "arbitrary"),
                vmem_limit_bytes=vmem_limit,
            ),
        )(xs_p, wi_p, wh_p, b_p, h0_p)

    try:
        out_p = run(single_buffer_consts=True)
    except Exception:
        # pipeline_mode=pl.Buffered(1) unsupported by this JAX/Mosaic build;
        # fall back to default double-buffered constants (semantics identical).
        out_p = run(single_buffer_consts=False)

    return out_p[:T, :B, :H]


def init_params(key, input_dim, hidden_dim, dtype=jnp.float32):
    """Deterministic init mimicking nn.Linear's U(-1/sqrt(fan_in), 1/sqrt(fan_in))."""
    k1, k2, k3, k4 = jax.random.split(key, 4)
    bound_i = 1.0 / jnp.sqrt(input_dim)
    bound_h = 1.0 / jnp.sqrt(hidden_dim)
    # Stored already transposed relative to PyTorch: (in_features, out_features).
    wi = jax.random.uniform(k1, (input_dim, hidden_dim), dtype, -bound_i, bound_i)
    bi = jax.random.uniform(k2, (1, hidden_dim), dtype, -bound_i, bound_i)
    wh = jax.random.uniform(k3, (hidden_dim, hidden_dim), dtype, -bound_h, bound_h)
    bh = jax.random.uniform(k4, (1, hidden_dim), dtype, -bound_h, bound_h)
    return wi, bi, wh, bh


if __name__ == "__main__":
    batch_size = 2
    input_dim = 16
    hidden_dim = 32
    seq_len = 8

    key = jax.random.PRNGKey(0)
    kx, kh, kp, ks = jax.random.split(key, 4)

    x = jax.random.normal(kx, (batch_size, input_dim), jnp.float32)
    h = jax.random.normal(kh, (batch_size, hidden_dim), jnp.float32)
    wi, bi, wh, bh = init_params(kp, input_dim, hidden_dim)

    # --- single-step RNNCell forward (matches the PyTorch module exactly) ---
    out = rnn_cell(x, h, wi, wh, bi, bh)
    out = jax.block_until_ready(out)
    ref = jnp.maximum(x @ wi + bi + h @ wh + bh, 0.0)
    assert out.shape == (batch_size, hidden_dim)
    assert jnp.allclose(out, ref, atol=1e-4, rtol=1e-4)

    # --- sequence variant: time loop inside one pallas_call, weights resident ---
    xs = jax.random.normal(ks, (seq_len, batch_size, input_dim), jnp.float32)
    hs = rnn_cell_sequence(xs, h, wi, wh, bi, bh)
    hs = jax.block_until_ready(hs)

    h_ref = h
    refs = []
    for t in range(seq_len):
        h_ref = jnp.maximum(xs[t] @ wi + bi + h_ref @ wh + bh, 0.0)
        refs.append(h_ref)
    refs = jnp.stack(refs)
    assert hs.shape == (seq_len, batch_size, hidden_dim)
    assert jnp.allclose(hs, refs, atol=1e-4, rtol=1e-4)

    print("KERNEL_OK")
</pallas_src>

<mosaic_0001>
module attributes {stable_mosaic.version = 11 : i64} {
  func.func @rnn_cell_kernel(%arg0: memref<8x128xf32, #tpu.memory_space<vmem>>, %arg1: memref<8x128xf32, #tpu.memory_space<vmem>>, %arg2: memref<128x128xf32, #tpu.memory_space<vmem>>, %arg3: memref<128x128xf32, #tpu.memory_space<vmem>>, %arg4: memref<1x128xf32, #tpu.memory_space<vmem>>, %arg5: memref<8x128xf32, #tpu.memory_space<vmem>>) attributes {dimension_semantics = [], scalar_prefetch = 0 : i64, scratch_operands = 0 : i64, tpu.core_type = #tpu.core_type<tc>} {
    %c0 = arith.constant 0 : index
    %c0_0 = arith.constant 0 : index
    %0 = vector.load %arg0[%c0, %c0_0] : memref<8x128xf32, #tpu.memory_space<vmem>>, vector<8x128xf32>
    %c0_1 = arith.constant 0 : index
    %c0_2 = arith.constant 0 : index
    %1 = vector.load %arg2[%c0_1, %c0_2] : memref<128x128xf32, #tpu.memory_space<vmem>>, vector<128x128xf32>
    %cst = arith.constant dense<0.000000e+00> : vector<8x128xf32>
    %2 = tpu.matmul %0, %1, %cst {dimension_numbers = #tpu.dot_dimension_numbers<[1], [0], [0], [1], [0, 0, 1, 1], [], []>} : vector<8x128xf32>, vector<128x128xf32>, vector<8x128xf32> -> vector<8x128xf32>
    %c0_3 = arith.constant 0 : index
    %c0_4 = arith.constant 0 : index
    %3 = vector.load %arg1[%c0_3, %c0_4] : memref<8x128xf32, #tpu.memory_space<vmem>>, vector<8x128xf32>
    %c0_5 = arith.constant 0 : index
    %c0_6 = arith.constant 0 : index
    %4 = vector.load %arg3[%c0_5, %c0_6] : memref<128x128xf32, #tpu.memory_space<vmem>>, vector<128x128xf32>
    %cst_7 = arith.constant dense<0.000000e+00> : vector<8x128xf32>
    %5 = tpu.matmul %3, %4, %cst_7 {dimension_numbers = #tpu.dot_dimension_numbers<[1], [0], [0], [1], [0, 0, 1, 1], [], []>} : vector<8x128xf32>, vector<128x128xf32>, vector<8x128xf32> -> vector<8x128xf32>
    %6 = arith.addf %2, %5 : vector<8x128xf32>
    %c0_8 = arith.constant 0 : index
    %c0_9 = arith.constant 0 : index
    %7 = vector.load %arg4[%c0_8, %c0_9] : memref<1x128xf32, #tpu.memory_space<vmem>>, vector<1x128xf32>
    %8 = vector.broadcast %7 : vector<1x128xf32> to vector<8x128xf32>
    %9 = arith.addf %6, %8 : vector<8x128xf32>
    %cst_10 = arith.constant 0.000000e+00 : f32
    %10 = vector.broadcast %cst_10 : f32 to vector<8x128xf32>
    %11 = arith.maximumf %9, %10 : vector<8x128xf32>
    %c0_11 = arith.constant 0 : index
    %c0_12 = arith.constant 0 : index
    %12 = vector.load %arg5[%c0_11, %c0_12] : memref<8x128xf32, #tpu.memory_space<vmem>>, vector<8x128xf32>
    tpu.vector_store %arg5[%c0_11, %c0_12], %11 {strides = array<i32>} : memref<8x128xf32, #tpu.memory_space<vmem>>, vector<8x128xf32>,
    return
  }
}

</mosaic_0001>

<llo_original>
// kernel: tpu_custom_call.1
$region0: #{tpu_custom_call.1}
  #allocation0 [shape = 'u32[]', space=smem, size = 0x4, offset = 0x4, fixed_abs, tag = 'smem constant byte address 0x4 - core index']
  #allocation1 [shape = 'u32[144,128]{1,0:T(1,128)}', space=vmem, size = 0x12000, scoped, tag = 'internal scratch']
  %s0 = inlined_call_operand.hbm [shape: f32[8,128], index: 0, kind: input, shape index: {}]
  %s1 = inlined_call_operand.hbm [shape: f32[8,128], index: 1, kind: input, shape index: {}]
  %s2 = inlined_call_operand.hbm [shape: f32[128,128], index: 2, kind: input, shape index: {}]
  %s3 = inlined_call_operand.hbm [shape: f32[128,128], index: 3, kind: input, shape index: {}]
  %s4 = inlined_call_operand.vmem [shape: f32[1,128], index: 4, kind: input, shape index: {}]
  %s5 = inlined_call_operand.hbm [shape: f32[8,128], index: 5, kind: output, shape index: {}]
  %s6 = sld [smem:[#allocation0]]
  $region46: #{tpu_custom_call.1} parent=0
    _
  %s8 = ssub.s32 1, %s6
  %s9 = scalar_select 0, %s8, %s6
  $region1: #{tpu_custom_call.1} parent=0
    #allocation2 [shape = 'u8[4096]{0}', space=vmem, size = 0x1000, scoped, tag = 'input window, operand 0, single buffered']
    #allocation3 [shape = 's32[1]{0}', space=sflag, size = 0x4, scoped, tag = 'scoped memory for tpu_custom_call.1']
    #allocation4 [shape = 's32[1]{0}', space=sflag, size = 0x4, scoped, tag = 'scoped memory for tpu_custom_call.1']
    #allocation5 [shape = 'u8[4096]{0}', space=vmem, size = 0x1000, scoped, tag = 'input window, operand 1, single buffered']
    #allocation6 [shape = 's32[1]{0}', space=sflag, size = 0x4, scoped, tag = 'scoped memory for tpu_custom_call.1']
    #allocation7 [shape = 'u8[65536]{0}', space=vmem, size = 0x10000, scoped, tag = 'input window, operand 2, single buffered']
    #allocation8 [shape = 'u8[65536]{0}', space=vmem, size = 0x10000, scoped, tag = 'input window, operand 3, single buffered']
    #allocation9 [shape = 's32[1]{0}', space=sflag, size = 0x4, scoped, tag = 'scoped memory for tpu_custom_call.1']
    #allocation10 [shape = 'u8[4096]{0}', space=vmem, size = 0x1000, scoped, tag = 'output window, operand 0, single buffered']
    %10 = vsyncpa [#allocation3], 0
    %11 = vsyncpa [#allocation6], 0
    %12 = vsyncpa [#allocation9], 0
    %13 = vsyncpa [#allocation4], 0
    // Predicated region
    $region2: #{tpu_custom_call.1} parent=1 // pred_check
      _
    $region3: #{tpu_custom_call.1} parent=1 // pred_check_branch
      %15 = sbr.rel (0) target = $region5
    $region4: #{tpu_custom_call.1} parent=1 // pred_region
      %s17 = ssub.s32 128, 128
      %18 = vsyncadd [#allocation3], %s17
      %s20 = sshll.u32 [#allocation2], 4
      %s21 = int_to_ptr.vmem [resolvable:$true] %s20
      %23 = dma.hbm_to_vmem [thread:$0]  %s0, 128, %s21, [#allocation3]
    $region5: #{tpu_custom_call.1} parent=1 // pred_fallthru
      _
    // Predicated region
    $region6: #{tpu_custom_call.1} parent=1 // pred_check
      _
    $region7: #{tpu_custom_call.1} parent=1 // pred_check_branch
      %25 = sbr.rel (0) target = $region9
    $region8: #{tpu_custom_call.1} parent=1 // pred_region
      %s27 = ssub.s32 128, 128
      %28 = vsyncadd [#allocation6], %s27
      %s30 = sshll.u32 [#allocation5], 4
      %s31 = int_to_ptr.vmem [resolvable:$true] %s30
      %33 = dma.hbm_to_vmem [thread:$0]  %s1, 128, %s31, [#allocation6]
    $region9: #{tpu_custom_call.1} parent=1 // pred_fallthru
      _
    // Predicated region
    $region10: #{tpu_custom_call.1} parent=1 // pred_check
      _
    $region11: #{tpu_custom_call.1} parent=1 // pred_check_branch
      %35 = sbr.rel (0) target = $region13
    $region12: #{tpu_custom_call.1} parent=1 // pred_region
      %s37 = ssub.s32 2048, 2048
      %38 = vsyncadd [#allocation6], %s37
      %s39 = sshll.u32 [#allocation7], 4
      %s40 = int_to_ptr.vmem [resolvable:$true] %s39
      %45 = dma.hbm_to_vmem [thread:$0]  %s2, 2048, %s40, [#allocation6], 128, 128, 8
    $region13: #{tpu_custom_call.1} parent=1 // pred_fallthru
      _
    // Predicated region
    $region14: #{tpu_custom_call.1} parent=1 // pred_check
      _
    $region15: #{tpu_custom_call.1} parent=1 // pred_check_branch
      %47 = sbr.rel (0) target = $region17
    $region16: #{tpu_custom_call.1} parent=1 // pred_region
      %s49 = ssub.s32 2048, 2048
      %50 = vsyncadd [#allocation9], %s49
      %s51 = sshll.u32 [#allocation8], 4
      %s52 = int_to_ptr.vmem [resolvable:$true] %s51
      %57 = dma.hbm_to_vmem [thread:$0]  %s3, 2048, %s52, [#allocation9], 128, 128, 8
    $region17: #{tpu_custom_call.1} parent=1 // pred_fallthru
      _
    // Predicated region
    $region18: #{tpu_custom_call.1} parent=1 // pred_check
      _
    $region19: #{tpu_custom_call.1} parent=1 // pred_check_branch
      %59 = sbr.rel (0) target = $region21
    $region20: #{tpu_custom_call.1} parent=1 // pred_region
      _
    $region21: #{tpu_custom_call.1} parent=1 // pred_fallthru
      _
    // Predicated region
    $region22: #{tpu_custom_call.1} parent=1 // pred_check
      _
    $region23: #{tpu_custom_call.1} parent=1 // pred_check_branch
      %61 = sbr.rel (0) target = $region25
    $region24: #{tpu_custom_call.1} parent=1 // pred_region
      %62 = dma.done [#allocation3], 128
    $region25: #{tpu_custom_call.1} parent=1 // pred_fallthru
      _
    // Predicated region
    $region26: #{tpu_custom_call.1} parent=1 // pred_check
      _
    $region27: #{tpu_custom_call.1} parent=1 // pred_check_branch
      %64 = sbr.rel (0) target = $region29
    $region28: #{tpu_custom_call.1} parent=1 // pred_region
      %65 = dma.done [#allocation6], 128
    $region29: #{tpu_custom_call.1} parent=1 // pred_fallthru
      _
    // Predicated region
    $region30: #{tpu_custom_call.1} parent=1 // pred_check
      _
    $region31: #{tpu_custom_call.1} parent=1 // pred_check_branch
      %67 = sbr.rel (0) target = $region33
    $region32: #{tpu_custom_call.1} parent=1 // pred_region
      %68 = dma.done [#allocation6], 2048
    $region33: #{tpu_custom_call.1} parent=1 // pred_fallthru
      _
    // Predicated region
    $region34: #{tpu_custom_call.1} parent=1 // pred_check
      _
    $region35: #{tpu_custom_call.1} parent=1 // pred_check_branch
      %70 = sbr.rel (0) target = $region37
    $region36: #{tpu_custom_call.1} parent=1 // pred_region
      %71 = dma.done [#allocation9], 2048
    $region37: #{tpu_custom_call.1} parent=1 // pred_fallthru
      _
    %v72 = vld [vmem:[#allocation2] sm:$0xff]
    %v73 = vld [vmem:[#allocation7] sm:$0xff]
    %v74 = vld [vmem:[#allocation7 + $0x8] sm:$0xff]
    %v75 = vld [vmem:[#allocation7 + $0x10] sm:$0xff]
    %v76 = vld [vmem:[#allocation7 + $0x18] sm:$0xff]
    %v77 = vld [vmem:[#allocation7 + $0x20] sm:$0xff]
    %v78 = vld [vmem:[#allocation7 + $0x28] sm:$0xff]
    %v79 = vld [vmem:[#allocation7 + $0x30] sm:$0xff]
    %v80 = vld [vmem:[#allocation7 + $0x38] sm:$0xff]
    %v81 = vld [vmem:[#allocation7 + $0x40] sm:$0xff]
    %v82 = vld [vmem:[#allocation7 + $0x48] sm:$0xff]
    %v83 = vld [vmem:[#allocation7 + $0x50] sm:$0xff]
    %v84 = vld [vmem:[#allocation7 + $0x58] sm:$0xff]
    %v85 = vld [vmem:[#allocation7 + $0x60] sm:$0xff]
    %v86 = vld [vmem:[#allocation7 + $0x68] sm:$0xff]
    %v87 = vld [vmem:[#allocation7 + $0x70] sm:$0xff]
    %v88 = vld [vmem:[#allocation7 + $0x78] sm:$0xff]
    %v89 = vld [vmem:[#allocation5] sm:$0xff]
    %v90 = vld [vmem:[#allocation8] sm:$0xff]
    %v91 = vld [vmem:[#allocation8 + $0x8] sm:$0xff]
    %v92 = vld [vmem:[#allocation8 + $0x10] sm:$0xff]
    %v93 = vld [vmem:[#allocation8 + $0x18] sm:$0xff]
    %v94 = vld [vmem:[#allocation8 + $0x20] sm:$0xff]
    %v95 = vld [vmem:[#allocation8 + $0x28] sm:$0xff]
    %v96 = vld [vmem:[#allocation8 + $0x30] sm:$0xff]
    %v97 = vld [vmem:[#allocation8 + $0x38] sm:$0xff]
    %v98 = vld [vmem:[#allocation8 + $0x40] sm:$0xff]
    %v99 = vld [vmem:[#allocation8 + $0x48] sm:$0xff]
    %v100 = vld [vmem:[#allocation8 + $0x50] sm:$0xff]
    %v101 = vld [vmem:[#allocation8 + $0x58] sm:$0xff]
    %v102 = vld [vmem:[#allocation8 + $0x60] sm:$0xff]
    %v103 = vld [vmem:[#allocation8 + $0x68] sm:$0xff]
    %v104 = vld [vmem:[#allocation8 + $0x70] sm:$0xff]
    %v105 = vld [vmem:[#allocation8 + $0x78] sm:$0xff]
    %106 = vmatprep.subr.mxu0 0.0
    %107 = vmatpush1.msra.mxu0 %v105
    %108 = vmatprep.subr.mxu0 0.0
    %109 = vmatpush1.msra.mxu0 %v104
    %110 = vmatprep.subr.mxu0 0.0
    %111 = vmatpush1.msra.mxu0 %v103
    %112 = vmatprep.subr.mxu0 0.0
    %113 = vmatpush1.msra.mxu0 %v102
    %114 = vmatprep.subr.mxu0 0.0
    %115 = vmatpush1.msra.mxu0 %v101
    %116 = vmatprep.subr.mxu0 0.0
    %117 = vmatpush1.msra.mxu0 %v100
    %118 = vmatprep.subr.mxu0 0.0
    %119 = vmatpush1.msra.mxu0 %v99
    %120 = vmatprep.subr.mxu0 0.0
    %121 = vmatpush1.msra.mxu0 %v98
    %122 = vmatprep.subr.mxu0 0.0
    %123 = vmatpush1.msra.mxu0 %v97
    %124 = vmatprep.subr.mxu0 0.0
    %125 = vmatpush1.msra.mxu0 %v96
    %126 = vmatprep.subr.mxu0 0.0
    %127 = vmatpush1.msra.mxu0 %v95
    %128 = vmatprep.subr.mxu0 0.0
    %129 = vmatpush1.msra.mxu0 %v94
    %130 = vmatprep.subr.mxu0 0.0
    %131 = vmatpush1.msra.mxu0 %v93
    %132 = vmatprep.subr.mxu0 0.0
    %133 = vmatpush1.msra.mxu0 %v92
    %134 = vmatprep.subr.mxu0 0.0
    %135 = vmatpush1.msra.mxu0 %v91
    %136 = vmatprep.subr.mxu0 0.0
    %137 = vmatpush1.msra.mxu0 %v90
    %138 = vmatprep.subr.mxu0 0.0
    %139 = vmatpush2.msra.mxu0 0.0
    %140 = vmatprep.subr.mxu0 0.0
    %141 = vmatpush2.msra.mxu0 0.0
    %142 = vmatprep.subr.mxu0 0.0
    %143 = vmatpush2.msra.mxu0 0.0
    %144 = vmatprep.subr.mxu0 0.0
    %145 = vmatpush2.msra.mxu0 0.0
    %146 = vmatprep.subr.mxu0 0.0
    %147 = vmatpush2.msra.mxu0 0.0
    %148 = vmatprep.subr.mxu0 0.0
    %149 = vmatpush2.msra.mxu0 0.0
    %150 = vmatprep.subr.mxu0 0.0
    %151 = vmatpush2.msra.mxu0 0.0
    %152 = vmatprep.subr.mxu0 0.0
    %153 = vmatpush2.msra.mxu0 0.0
    %154 = vmatprep.subr.mxu0 0.0
    %155 = vmatpush2.msra.mxu0 0.0
    %156 = vmatprep.subr.mxu0 0.0
    %157 = vmatpush2.msra.mxu0 0.0
    %158 = vmatprep.subr.mxu0 0.0
    %159 = vmatpush2.msra.mxu0 0.0
    %160 = vmatprep.subr.mxu0 0.0
    %161 = vmatpush2.msra.mxu0 0.0
    %162 = vmatprep.subr.mxu0 0.0
    %163 = vmatpush2.msra.mxu0 0.0
    %164 = vmatprep.subr.mxu0 0.0
    %165 = vmatpush2.msra.mxu0 0.0
    %166 = vmatprep.subr.mxu0 0.0
    %167 = vmatpush2.msra.mxu0 0.0
    %168 = vmatprep.subr.mxu0 0.0
    %169 = vmatpush2.msra.mxu0 0.0
    %170 = vmatprep.mubr.f32.mxu0 0.0
    %171 = vmatmul.mubr.f32.gmra.mxu0 %v89
    %v172 = vpop.f32.mrf.mxu0
    %v173 = vadd.f32 0.0, %v172
    %v174 = vpop.f32.mrf.mxu0
    %175 = vdwg.mxu0
    %176 = vmatprep.subr.mxu0 0.0
    %177 = vmatpush1.msra.mxu0 %v88
    %178 = vmatprep.subr.mxu0 0.0
    %179 = vmatpush1.msra.mxu0 %v87
    %180 = vmatprep.subr.mxu0 0.0
    %181 = vmatpush1.msra.mxu0 %v86
    %182 = vmatprep.subr.mxu0 0.0
    %183 = vmatpush1.msra.mxu0 %v85
    %184 = vmatprep.subr.mxu0 0.0
    %185 = vmatpush1.msra.mxu0 %v84
    %186 = vmatprep.subr.mxu0 0.0
    %187 = vmatpush1.msra.mxu0 %v83
    %188 = vmatprep.subr.mxu0 0.0
    %189 = vmatpush1.msra.mxu0 %v82
    %190 = vmatprep.subr.mxu0 0.0
    %191 = vmatpush1.msra.mxu0 %v81
    %192 = vmatprep.subr.mxu0 0.0
    %193 = vmatpush1.msra.mxu0 %v80
    %194 = vmatprep.subr.mxu0 0.0
    %195 = vmatpush1.msra.mxu0 %v79
    %196 = vmatprep.subr.mxu0 0.0
    %197 = vmatpush1.msra.mxu0 %v78
    %198 = vmatprep.subr.mxu0 0.0
    %199 = vmatpush1.msra.mxu0 %v77
    %200 = vmatprep.subr.mxu0 0.0
    %201 = vmatpush1.msra.mxu0 %v76
    %202 = vmatprep.subr.mxu0 0.0
    %203 = vmatpush1.msra.mxu0 %v75
    %204 = vmatprep.subr.mxu0 0.0
    %205 = vmatpush1.msra.mxu0 %v74
    %206 = vmatprep.subr.mxu0 0.0
    %207 = vmatpush1.msra.mxu0 %v73
    %208 = vmatprep.subr.mxu0 0.0
    %209 = vmatpush2.msra.mxu0 0.0
    %210 = vmatprep.subr.mxu0 0.0
    %211 = vmatpush2.msra.mxu0 0.0
    %212 = vmatprep.subr.mxu0 0.0
    %213 = vmatpush2.msra.mxu0 0.0
    %214 = vmatprep.subr.mxu0 0.0
    %215 = vmatpush2.msra.mxu0 0.0
    %216 = vmatprep.subr.mxu0 0.0
    %217 = vmatpush2.msra.mxu0 0.0
    %218 = vmatprep.subr.mxu0 0.0
    %219 = vmatpush2.msra.mxu0 0.0
    %220 = vmatprep.subr.mxu0 0.0
    %221 = vmatpush2.msra.mxu0 0.0
    %222 = vmatprep.subr.mxu0 0.0
    %223 = vmatpush2.msra.mxu0 0.0
    %224 = vmatprep.subr.mxu0 0.0
    %225 = vmatpush2.msra.mxu0 0.0
    %226 = vmatprep.subr.mxu0 0.0
    %227 = vmatpush2.msra.mxu0 0.0
    %228 = vmatprep.subr.mxu0 0.0
    %229 = vmatpush2.msra.mxu0 0.0
    %230 = vmatprep.subr.mxu0 0.0
    %231 = vmatpush2.msra.mxu0 0.0
    %232 = vmatprep.subr.mxu0 0.0
    %233 = vmatpush2.msra.mxu0 0.0
    %234 = vmatprep.subr.mxu0 0.0
    %235 = vmatpush2.msra.mxu0 0.0
    %236 = vmatprep.subr.mxu0 0.0
    %237 = vmatpush2.msra.mxu0 0.0
    %238 = vmatprep.subr.mxu0 0.0
    %239 = vmatpush2.msra.mxu0 0.0
    %240 = vmatprep.mubr.f32.mxu0 0.0
    %241 = vmatmul.mubr.f32.gmra.mxu0 %v72
    %v242 = vpop.f32.mrf.mxu0
    %v243 = vadd.f32 %v173, %v242
    %v244 = vpop.f32.mrf.mxu0
    %245 = vdwg.mxu0
    %v246 = vld [vmem:[%s4] sm:$0x1]
    %v248 = vlaneseq
    %v249 = vshrl.u32 %v248, 7
    %v250 = vsub.s32 0, %v249
    %v251 = vrot.slane %v246, %v250
    %v253 = vadd.f32 %v243, %v251
    %v254 = vmax.f32 %v253, 0.0
    %255 = vst [vmem:[#allocation10] sm:$0xff] %v254
    // Predicated region
    $region38: #{tpu_custom_call.1} parent=1 // pred_check
      _
    $region39: #{tpu_custom_call.1} parent=1 // pred_check_branch
      %257 = sbr.rel (0) target = $region41
    $region40: #{tpu_custom_call.1} parent=1 // pred_region
      %s259 = ssub.s32 128, 128
      %260 = vsyncadd [#allocation4], %s259
      %s262 = sshll.u32 [#allocation10], 4
      %s263 = int_to_ptr.vmem [resolvable:$true] %s262
      %265 = dma.vmem_to_hbm [thread:$0]  %s263, 128, %s5, [#allocation4]
    $region41: #{tpu_custom_call.1} parent=1 // pred_fallthru
      _
    // Predicated region
    $region42: #{tpu_custom_call.1} parent=1 // pred_check
      _
    $region43: #{tpu_custom_call.1} parent=1 // pred_check_branch
      %267 = sbr.rel (0) target = $region45
    $region44: #{tpu_custom_call.1} parent=1 // pred_region
      %268 = dma.done [#allocation4], 128
    $region45: #{tpu_custom_call.1} parent=1 // pred_fallthru
      _
    %269 = vsyncpa [#allocation3], 1
    %270 = vsyncpa [#allocation6], 1
    %271 = vsyncpa [#allocation9], 1
    %272 = vsyncpa [#allocation4], 1

</llo_original>
